<compile_context>
chip_gen: v7x
topology: tpu7x:2x2x1
jax: 0.10.0
libtpu: 0.0.40
codegen_flags: <defaults>
</compile_context>

<pallas_src>
import functools

import jax
import jax.numpy as jnp
from jax.experimental import pallas as pl
from jax.experimental.pallas import tpu as pltpu


def _vmem_capacity_bytes():
    """Physical VMEM per TensorCore, with a conservative (v7x) fallback."""
    try:
        cap = getattr(pltpu.get_tpu_info(), "vmem_capacity_bytes", None)
        if cap:
            return int(cap)
    except Exception:
        pass
    return 64 << 20


def _pick_row_block(N, C, H, W, itemsize, vmem_cap):
    """Rows of the image processed per grid step."""
    if W % 128 != 0:
        # Halo blocks would violate the last-dim-128 BlockSpec rule.
        return H
    budget = max(1 << 20, vmem_cap // 16)      # per x-block bytes (~4 MiB v7x)
    min_steps = 8                              # feed both v7x TensorCores
    rb = H
    for d in sorted((d for d in range(1, H + 1) if H % d == 0), reverse=True):
        rb = d
        if C * d * W * itemsize <= budget and N * (H // d) >= min_steps:
            break
    return rb


def _chunk_plan(C, lane_len):
    """Channel chunking for the reduce / scale loops (~128 KiB f32 chunks)."""
    rows = max(1, (128 * 1024) // max(1, lane_len * 4))
    if rows >= 8:
        rows = (rows // 8) * 8                 # sublane-aligned chunk height
    chunk_c = max(1, min(C, rows))
    num_full = C // chunk_c
    rem = C % chunk_c
    unroll = num_full if num_full <= 8 else 4  # partial unroll on long loops
    return chunk_c, num_full, rem, unroll


def _spatial_attention_kernel(*args, W, chunk, use_halo):
    if use_halo:
        (b_ref, wm_ref, x_ref, top_ref, bot_ref,
         o_ref, feat_ref, attn_ref) = args
    else:
        b_ref, wm_ref, x_ref, o_ref, feat_ref, attn_ref = args
        top_ref = bot_ref = None

    chunk_c, num_full, rem, unroll = chunk
    RBW = x_ref.shape[1]                 # lanes covered by this row block
    EXT = feat_ref.shape[1]              # RBW (+ 2*W when halo rows present)
    main_off = W if use_halo else 0      # lane offset of the block's own rows

    # ---- channel sum / max into the VMEM feat scratch (no big loop carries) -
    def reduce_into(src_ref, off):
        L = src_ref.shape[1]
        feat_ref[0:1, off:off + L] = jnp.zeros((1, L), jnp.float32)
        feat_ref[1:2, off:off + L] = jnp.full((1, L), -jnp.inf, jnp.float32)

        def accum(c0, rows):
            xc = src_ref[pl.ds(c0, rows), :].astype(jnp.float32)
            feat_ref[0:1, off:off + L] = (
                feat_ref[0:1, off:off + L] + jnp.sum(xc, axis=0, keepdims=True))
            feat_ref[1:2, off:off + L] = jnp.maximum(
                feat_ref[1:2, off:off + L], jnp.max(xc, axis=0, keepdims=True))

        def body(i, carry):
            accum(pl.multiple_of(i * chunk_c, chunk_c), chunk_c)
            return carry

        jax.lax.fori_loop(0, num_full, body, 0, unroll=unroll)
        if rem:                                   # static tail chunk
            accum(num_full * chunk_c, rem)

    reduce_into(x_ref, main_off)                  # this block's rows
    if use_halo:
        reduce_into(top_ref, 0)                   # clamped row above the block
        reduce_into(bot_ref, main_off + RBW)      # clamped row below the block

    # ---- 3x3 SAME conv (2 -> 1 channels), flat-window formulation ----------
    # Tap (dy, dx) reads the fused [sum; max] slab at lane offset
    # main_off + (dy-1)*W + (dx-1); out-of-range lanes are zero-filled and the
    # pre-multiplied weight*boundary-mask planes (wm_ref) zero every invalid
    # tap, so halo clamping / padding never leaks into valid outputs.
    def window(start):
        lo_pad = min(max(0, -start), RBW)
        hi_pad = min(max(0, start + RBW - EXT), RBW - lo_pad)
        s0 = start + lo_pad
        s1 = start + RBW - hi_pad
        parts = []
        if lo_pad:
            parts.append(jnp.zeros((2, lo_pad), jnp.float32))
        if s1 > s0:
            parts.append(feat_ref[:, s0:s1])
        if hi_pad:
            parts.append(jnp.zeros((2, hi_pad), jnp.float32))
        return parts[0] if len(parts) == 1 else jnp.concatenate(parts, axis=1)

    acc = jnp.full((1, RBW), b_ref[0], jnp.float32)
    for dy in range(3):
        for dx in range(3):
            t = dy * 3 + dx
            win = window(main_off + (dy - 1) * W + (dx - 1))
            acc = acc + wm_ref[t:t + 1, :] * win[0:1, :]          # mean plane
            acc = acc + wm_ref[9 + t:10 + t, :] * win[1:2, :]     # max plane

    attn_ref[...] = jax.nn.sigmoid(acc).astype(attn_ref.dtype)

    # ---- scale pass: x * attn, in x's dtype, lane-dense chunked stores ------
    def scale(c0, rows):
        o_ref[pl.ds(c0, rows), :] = x_ref[pl.ds(c0, rows), :] * attn_ref[...]

    def scale_body(i, carry):
        scale(pl.multiple_of(i * chunk_c, chunk_c), chunk_c)
        return carry

    jax.lax.fori_loop(0, num_full, scale_body, 0, unroll=unroll)
    if rem:
        scale(num_full * chunk_c, rem)


def spatial_attention(x, w, b, *, donate_x=False):
    """x: (N, C, H, W); w: (1, 2, 3, 3) conv weight; b: (1,) conv bias."""
    N, C, H, W = x.shape
    HW = H * W
    itemsize = x.dtype.itemsize

    vmem_cap = _vmem_capacity_bytes()
    RB = _pick_row_block(N, C, H, W, itemsize, vmem_cap)
    num_rb = H // RB
    RBW = RB * W
    use_halo = RB < H
    EXT = RBW + 2 * W if use_halo else RBW
    chunk = _chunk_plan(C, RBW)

    # Free layout plumbing: merge H,W (no pad, no copy).
    x_flat = x.reshape(N, C, HW)

    # Pre-multiplied (conv weight x boundary mask) planes, one per tap and
    # pooled channel; 1/C of the channel mean is folded in as well.
    w = w.astype(jnp.float32)
    b = b.reshape(-1).astype(jnp.float32)
    pos = jnp.arange(HW, dtype=jnp.int32)
    row, col = pos // W, pos % W
    planes = []
    for ci, scale in ((0, 1.0 / C), (1, 1.0)):         # mean plane, max plane
        for dy in range(3):
            for dx in range(3):
                ok = ((row + dy - 1 >= 0) & (row + dy - 1 < H) &
                      (col + dx - 1 >= 0) & (col + dx - 1 < W))
                planes.append(ok.astype(jnp.float32) * (w[0, ci, dy, dx] * scale))
    wm = jnp.stack(planes, axis=0)                     # (18, HW) f32

    in_specs = [
        pl.BlockSpec(memory_space=pltpu.MemorySpace.SMEM),        # conv bias
        pl.BlockSpec((18, RBW), lambda n, i: (0, i)),             # weight*mask
        pl.BlockSpec((None, C, RBW), lambda n, i: (n, 0, i)),     # block rows
    ]
    inputs = [b, wm, x_flat]
    if use_halo:
        # One clamped halo row above / below the block (block size W along the
        # flat HW axis, so the block index is the global row index).
        in_specs += [
            pl.BlockSpec((None, C, W),
                         lambda n, i: (n, 0, jnp.maximum(i * RB - 1, 0))),
            pl.BlockSpec((None, C, W),
                         lambda n, i: (n, 0, jnp.minimum((i + 1) * RB, H - 1))),
        ]
        inputs += [x_flat, x_flat]

    # VMEM budget: double-buffered in/out blocks + masks + halos + scratch.
    block_bytes = C * RBW * itemsize
    need = (4 * block_bytes + 2 * 18 * RBW * 4 + 2 * EXT * 4 + RBW * itemsize
            + (8 * C * W * itemsize if use_halo else 0) + (4 << 20))
    vmem_limit = int(min(max(need, 8 << 20), 0.75 * vmem_cap))

    kernel = functools.partial(_spatial_attention_kernel,
                               W=W, chunk=chunk, use_halo=use_halo)

    # Aliasing x with the output is only safe when no later grid step re-reads
    # x (i.e. no halo rows); off by default to avoid donating a shared buffer.
    aliases = {2: 0} if (donate_x and not use_halo) else {}

    out_flat = pl.pallas_call(
        kernel,
        out_shape=jax.ShapeDtypeStruct((N, C, HW), x.dtype),
        grid=(N, num_rb),
        in_specs=in_specs,
        out_specs=pl.BlockSpec((None, C, RBW), lambda n, i: (n, 0, i)),
        scratch_shapes=[pltpu.VMEM((2, EXT), jnp.float32),   # [sum ; max]
                        pltpu.VMEM((1, RBW), x.dtype)],      # attention map
        input_output_aliases=aliases,
        compiler_params=pltpu.CompilerParams(
            dimension_semantics=("parallel", "parallel"),
            vmem_limit_bytes=vmem_limit),
    )(*inputs)

    return out_flat.reshape(N, C, H, W)


def reference(x, w, b):
    """Pure-JAX reference matching the PyTorch module exactly."""
    xf = x.astype(jnp.float32)
    ch_mean = jnp.mean(xf, axis=1, keepdims=True)
    ch_max = jnp.max(xf, axis=1, keepdims=True)
    combined = jnp.concatenate([ch_mean, ch_max], axis=1)   # (N, 2, H, W)
    conv = jax.lax.conv_general_dilated(
        combined, w.astype(jnp.float32), window_strides=(1, 1), padding="SAME",
        dimension_numbers=("NCHW", "OIHW", "NCHW"))
    attn = jax.nn.sigmoid(conv + b.reshape(1, 1, 1, 1).astype(jnp.float32))
    return (xf * attn).astype(x.dtype)


if __name__ == "__main__":
    key = jax.random.PRNGKey(0)
    kx, kw, kb, kx2, kx3 = jax.random.split(key, 5)

    # Conv2d(2, 1, kernel_size=3, padding=1) params (kaiming-uniform bound).
    fan_in = 2 * 3 * 3
    bound = float(1.0 / (fan_in ** 0.5))
    w = jax.random.uniform(kw, (1, 2, 3, 3), minval=-bound, maxval=bound,
                           dtype=jnp.float32)
    b = jax.random.uniform(kb, (1,), minval=-bound, maxval=bound,
                           dtype=jnp.float32)

    # Case 1: small, lane-unaligned W -> single (C, H*W) block per batch.
    x1 = jax.random.normal(kx, (2, 4, 16, 16), dtype=jnp.float32)
    out1 = jax.block_until_ready(spatial_attention(x1, w, b))
    ref1 = jax.block_until_ready(reference(x1, w, b))
    assert out1.shape == x1.shape and out1.dtype == x1.dtype
    assert jnp.allclose(out1, ref1, atol=1e-5, rtol=1e-5), "case1 mismatch"

    # Case 2: lane-aligned W -> row-split grid with 1-row halos (v7x path).
    x2 = jax.random.normal(kx2, (1, 8, 16, 128), dtype=jnp.float32)
    out2 = jax.block_until_ready(spatial_attention(x2, w, b))
    ref2 = jax.block_until_ready(reference(x2, w, b))
    assert out2.shape == x2.shape and out2.dtype == x2.dtype
    assert jnp.allclose(out2, ref2, atol=1e-5, rtol=1e-5), "case2 mismatch"

    # Case 3: bf16 activations -> scale pass stays in bf16.
    x3 = jax.random.normal(kx3, (2, 16, 8, 256), dtype=jnp.bfloat16)
    out3 = jax.block_until_ready(spatial_attention(x3, w, b))
    ref3 = jax.block_until_ready(reference(x3, w, b))
    assert out3.shape == x3.shape and out3.dtype == x3.dtype
    assert jnp.allclose(out3.astype(jnp.float32), ref3.astype(jnp.float32),
                        atol=3e-2, rtol=3e-2), "case3 mismatch"

    print("KERNEL_OK")
</pallas_src>

<mosaic_0001>
module attributes {stable_mosaic.version = 11 : i64} {
  func.func @_spatial_attention_kernel(%arg0: i32, %arg1: i32, %arg2: memref<1xf32, #tpu.memory_space<smem>>, %arg3: memref<18x256xf32, #tpu.memory_space<vmem>>, %arg4: memref<1x4x256xf32, #tpu.memory_space<vmem>>, %arg5: memref<1x4x256xf32, #tpu.memory_space<vmem>>, %arg6: memref<2x256xf32, #tpu.memory_space<vmem>>, %arg7: memref<1x256xf32, #tpu.memory_space<vmem>>) attributes {dimension_semantics = [#tpu.dimension_semantics<parallel>, #tpu.dimension_semantics<parallel>], iteration_bounds = array<i64: 2, 1>, scalar_prefetch = 0 : i64, scratch_operands = 2 : i64, tpu.core_type = #tpu.core_type<tc>, window_params = [{transform_indices = @transform_0, window_bounds = array<i64: 1>}, {transform_indices = @transform_1, window_bounds = array<i64: 18, 256>}, {transform_indices = @transform_2, window_bounds = array<i64: 1, 4, 256>}, {transform_indices = @transform_3, window_bounds = array<i64: 1, 4, 256>}]} {
    %cst = arith.constant 0.000000e+00 : f32
    %0 = vector.broadcast %cst : f32 to vector<1x256xf32>
    %c0 = arith.constant 0 : index
    %c0_0 = arith.constant 0 : index
    %1 = vector.load %arg6[%c0, %c0_0] : memref<2x256xf32, #tpu.memory_space<vmem>>, vector<1x256xf32>
    tpu.vector_store %arg6[%c0, %c0_0], %0 {strides = array<i32>} : memref<2x256xf32, #tpu.memory_space<vmem>>, vector<1x256xf32>,
    %cst_1 = arith.constant 0xFF800000 : f32
    %2 = vector.broadcast %cst_1 : f32 to vector<1x256xf32>
    %c1 = arith.constant 1 : index
    %c0_2 = arith.constant 0 : index
    %3 = vector.load %arg6[%c1, %c0_2] : memref<2x256xf32, #tpu.memory_space<vmem>>, vector<1x256xf32>
    tpu.vector_store %arg6[%c1, %c0_2], %2 {strides = array<i32>} : memref<2x256xf32, #tpu.memory_space<vmem>>, vector<1x256xf32>,
    %c0_i32 = arith.constant 0 : i32
    %c4_i32 = arith.constant 4 : i32
    %4 = arith.muli %c0_i32, %c4_i32 : i32
    %5 = tpu.assume_multiple %4, 4 : i32
    %c0_3 = arith.constant 0 : index
    %6 = arith.index_cast %5 : i32 to index
    %c0_4 = arith.constant 0 : index
    %7 = vector.load %arg4[%c0_3, %6, %c0_4] : memref<1x4x256xf32, #tpu.memory_space<vmem>>, vector<1x4x256xf32>
    %8 = vector.shape_cast %7 : vector<1x4x256xf32> to vector<4x256xf32>
    %c0_5 = arith.constant 0 : index
    %c0_6 = arith.constant 0 : index
    %9 = vector.load %arg6[%c0_5, %c0_6] : memref<2x256xf32, #tpu.memory_space<vmem>>, vector<1x256xf32>
    %cst_7 = arith.constant dense<0.000000e+00> : vector<256xf32>
    %10 = vector.multi_reduction <add>, %8, %cst_7 [0] : vector<4x256xf32> to vector<256xf32>
    %11 = vector.shape_cast %10 : vector<256xf32> to vector<1x256xf32>
    %12 = arith.addf %9, %11 : vector<1x256xf32>
    %c0_8 = arith.constant 0 : index
    %c0_9 = arith.constant 0 : index
    %13 = vector.load %arg6[%c0_8, %c0_9] : memref<2x256xf32, #tpu.memory_space<vmem>>, vector<1x256xf32>
    tpu.vector_store %arg6[%c0_8, %c0_9], %12 {strides = array<i32>} : memref<2x256xf32, #tpu.memory_space<vmem>>, vector<1x256xf32>,
    %c1_10 = arith.constant 1 : index
    %c0_11 = arith.constant 0 : index
    %14 = vector.load %arg6[%c1_10, %c0_11] : memref<2x256xf32, #tpu.memory_space<vmem>>, vector<1x256xf32>
    %cst_12 = arith.constant dense<0xFF800000> : vector<256xf32>
    %15 = vector.multi_reduction <maximumf>, %8, %cst_12 [0] : vector<4x256xf32> to vector<256xf32>
    %16 = vector.shape_cast %15 : vector<256xf32> to vector<1x256xf32>
    %17 = arith.maximumf %14, %16 : vector<1x256xf32>
    %c1_13 = arith.constant 1 : index
    %c0_14 = arith.constant 0 : index
    %18 = vector.load %arg6[%c1_13, %c0_14] : memref<2x256xf32, #tpu.memory_space<vmem>>, vector<1x256xf32>
    tpu.vector_store %arg6[%c1_13, %c0_14], %17 {strides = array<i32>} : memref<2x256xf32, #tpu.memory_space<vmem>>, vector<1x256xf32>,
    %c1_i32 = arith.constant 1 : i32
    %c0_15 = arith.constant 0 : index
    %19 = memref.load %arg2[%c0_15] : memref<1xf32, #tpu.memory_space<smem>>
    %20 = vector.broadcast %19 : f32 to vector<1x256xf32>
    %cst_16 = arith.constant 0.000000e+00 : f32
    %21 = vector.broadcast %cst_16 : f32 to vector<2x17xf32>
    %c0_17 = arith.constant 0 : index
    %c0_18 = arith.constant 0 : index
    %22 = vector.load %arg6[%c0_17, %c0_18] : memref<2x256xf32, #tpu.memory_space<vmem>>, vector<2x239xf32>
    %23 = tpu.concatenate %21, %22 in 1 : vector<2x17xf32>, vector<2x239xf32> -> vector<2x256xf32>
    %c0_19 = arith.constant 0 : index
    %c0_20 = arith.constant 0 : index
    %24 = vector.load %arg3[%c0_19, %c0_20] : memref<18x256xf32, #tpu.memory_space<vmem>>, vector<1x256xf32>
    %25 = vector.extract_strided_slice %23 {offsets = [0, 0], sizes = [1, 256], strides = [1, 1]} : vector<2x256xf32> to vector<1x256xf32>
    %26 = arith.mulf %24, %25 : vector<1x256xf32>
    %27 = arith.addf %20, %26 : vector<1x256xf32>
    %c9 = arith.constant 9 : index
    %c0_21 = arith.constant 0 : index
    %28 = vector.load %arg3[%c9, %c0_21] : memref<18x256xf32, #tpu.memory_space<vmem>>, vector<1x256xf32>
    %29 = vector.extract_strided_slice %23 {offsets = [1, 0], sizes = [1, 256], strides = [1, 1]} : vector<2x256xf32> to vector<1x256xf32>
    %30 = arith.mulf %28, %29 : vector<1x256xf32>
    %31 = arith.addf %27, %30 : vector<1x256xf32>
    %cst_22 = arith.constant 0.000000e+00 : f32
    %32 = vector.broadcast %cst_22 : f32 to vector<2x16xf32>
    %c0_23 = arith.constant 0 : index
    %c0_24 = arith.constant 0 : index
    %33 = vector.load %arg6[%c0_23, %c0_24] : memref<2x256xf32, #tpu.memory_space<vmem>>, vector<2x240xf32>
    %34 = tpu.concatenate %32, %33 in 1 : vector<2x16xf32>, vector<2x240xf32> -> vector<2x256xf32>
    %c1_25 = arith.constant 1 : index
    %c0_26 = arith.constant 0 : index
    %35 = vector.load %arg3[%c1_25, %c0_26] : memref<18x256xf32, #tpu.memory_space<vmem>>, vector<1x256xf32>
    %36 = vector.extract_strided_slice %34 {offsets = [0, 0], sizes = [1, 256], strides = [1, 1]} : vector<2x256xf32> to vector<1x256xf32>
    %37 = arith.mulf %35, %36 : vector<1x256xf32>
    %38 = arith.addf %31, %37 : vector<1x256xf32>
    %c10 = arith.constant 10 : index
    %c0_27 = arith.constant 0 : index
    %39 = vector.load %arg3[%c10, %c0_27] : memref<18x256xf32, #tpu.memory_space<vmem>>, vector<1x256xf32>
    %40 = vector.extract_strided_slice %34 {offsets = [1, 0], sizes = [1, 256], strides = [1, 1]} : vector<2x256xf32> to vector<1x256xf32>
    %41 = arith.mulf %39, %40 : vector<1x256xf32>
    %42 = arith.addf %38, %41 : vector<1x256xf32>
    %cst_28 = arith.constant 0.000000e+00 : f32
    %43 = vector.broadcast %cst_28 : f32 to vector<2x15xf32>
    %c0_29 = arith.constant 0 : index
    %c0_30 = arith.constant 0 : index
    %44 = vector.load %arg6[%c0_29, %c0_30] : memref<2x256xf32, #tpu.memory_space<vmem>>, vector<2x241xf32>
    %45 = tpu.concatenate %43, %44 in 1 : vector<2x15xf32>, vector<2x241xf32> -> vector<2x256xf32>
    %c2 = arith.constant 2 : index
    %c0_31 = arith.constant 0 : index
    %46 = vector.load %arg3[%c2, %c0_31] : memref<18x256xf32, #tpu.memory_space<vmem>>, vector<1x256xf32>
    %47 = vector.extract_strided_slice %45 {offsets = [0, 0], sizes = [1, 256], strides = [1, 1]} : vector<2x256xf32> to vector<1x256xf32>
    %48 = arith.mulf %46, %47 : vector<1x256xf32>
    %49 = arith.addf %42, %48 : vector<1x256xf32>
    %c11 = arith.constant 11 : index
    %c0_32 = arith.constant 0 : index
    %50 = vector.load %arg3[%c11, %c0_32] : memref<18x256xf32, #tpu.memory_space<vmem>>, vector<1x256xf32>
    %51 = vector.extract_strided_slice %45 {offsets = [1, 0], sizes = [1, 256], strides = [1, 1]} : vector<2x256xf32> to vector<1x256xf32>
    %52 = arith.mulf %50, %51 : vector<1x256xf32>
    %53 = arith.addf %49, %52 : vector<1x256xf32>
    %cst_33 = arith.constant 0.000000e+00 : f32
    %54 = vector.broadcast %cst_33 : f32 to vector<2x1xf32>
    %c0_34 = arith.constant 0 : index
    %c0_35 = arith.constant 0 : index
    %55 = vector.load %arg6[%c0_34, %c0_35] : memref<2x256xf32, #tpu.memory_space<vmem>>, vector<2x255xf32>
    %56 = tpu.concatenate %54, %55 in 1 : vector<2x1xf32>, vector<2x255xf32> -> vector<2x256xf32>
    %c3 = arith.constant 3 : index
    %c0_36 = arith.constant 0 : index
    %57 = vector.load %arg3[%c3, %c0_36] : memref<18x256xf32, #tpu.memory_space<vmem>>, vector<1x256xf32>
    %58 = vector.extract_strided_slice %56 {offsets = [0, 0], sizes = [1, 256], strides = [1, 1]} : vector<2x256xf32> to vector<1x256xf32>
    %59 = arith.mulf %57, %58 : vector<1x256xf32>
    %60 = arith.addf %53, %59 : vector<1x256xf32>
    %c12 = arith.constant 12 : index
    %c0_37 = arith.constant 0 : index
    %61 = vector.load %arg3[%c12, %c0_37] : memref<18x256xf32, #tpu.memory_space<vmem>>, vector<1x256xf32>
    %62 = vector.extract_strided_slice %56 {offsets = [1, 0], sizes = [1, 256], strides = [1, 1]} : vector<2x256xf32> to vector<1x256xf32>
    %63 = arith.mulf %61, %62 : vector<1x256xf32>
    %64 = arith.addf %60, %63 : vector<1x256xf32>
    %c0_38 = arith.constant 0 : index
    %c0_39 = arith.constant 0 : index
    %65 = vector.load %arg6[%c0_38, %c0_39] : memref<2x256xf32, #tpu.memory_space<vmem>>, vector<2x256xf32>
    %c4 = arith.constant 4 : index
    %c0_40 = arith.constant 0 : index
    %66 = vector.load %arg3[%c4, %c0_40] : memref<18x256xf32, #tpu.memory_space<vmem>>, vector<1x256xf32>
    %67 = vector.extract_strided_slice %65 {offsets = [0, 0], sizes = [1, 256], strides = [1, 1]} : vector<2x256xf32> to vector<1x256xf32>
    %68 = arith.mulf %66, %67 : vector<1x256xf32>
    %69 = arith.addf %64, %68 : vector<1x256xf32>
    %c13 = arith.constant 13 : index
    %c0_41 = arith.constant 0 : index
    %70 = vector.load %arg3[%c13, %c0_41] : memref<18x256xf32, #tpu.memory_space<vmem>>, vector<1x256xf32>
    %71 = vector.extract_strided_slice %65 {offsets = [1, 0], sizes = [1, 256], strides = [1, 1]} : vector<2x256xf32> to vector<1x256xf32>
    %72 = arith.mulf %70, %71 : vector<1x256xf32>
    %73 = arith.addf %69, %72 : vector<1x256xf32>
    %c0_42 = arith.constant 0 : index
    %c1_43 = arith.constant 1 : index
    %74 = vector.load %arg6[%c0_42, %c1_43] : memref<2x256xf32, #tpu.memory_space<vmem>>, vector<2x255xf32>
    %cst_44 = arith.constant 0.000000e+00 : f32
    %75 = vector.broadcast %cst_44 : f32 to vector<2x1xf32>
    %76 = tpu.concatenate %74, %75 in 1 : vector<2x255xf32>, vector<2x1xf32> -> vector<2x256xf32>
    %c5 = arith.constant 5 : index
    %c0_45 = arith.constant 0 : index
    %77 = vector.load %arg3[%c5, %c0_45] : memref<18x256xf32, #tpu.memory_space<vmem>>, vector<1x256xf32>
    %78 = vector.extract_strided_slice %76 {offsets = [0, 0], sizes = [1, 256], strides = [1, 1]} : vector<2x256xf32> to vector<1x256xf32>
    %79 = arith.mulf %77, %78 : vector<1x256xf32>
    %80 = arith.addf %73, %79 : vector<1x256xf32>
    %c14 = arith.constant 14 : index
    %c0_46 = arith.constant 0 : index
    %81 = vector.load %arg3[%c14, %c0_46] : memref<18x256xf32, #tpu.memory_space<vmem>>, vector<1x256xf32>
    %82 = vector.extract_strided_slice %76 {offsets = [1, 0], sizes = [1, 256], strides = [1, 1]} : vector<2x256xf32> to vector<1x256xf32>
    %83 = arith.mulf %81, %82 : vector<1x256xf32>
    %84 = arith.addf %80, %83 : vector<1x256xf32>
    %c0_47 = arith.constant 0 : index
    %c15 = arith.constant 15 : index
    %85 = vector.load %arg6[%c0_47, %c15] : memref<2x256xf32, #tpu.memory_space<vmem>>, vector<2x241xf32>
    %cst_48 = arith.constant 0.000000e+00 : f32
    %86 = vector.broadcast %cst_48 : f32 to vector<2x15xf32>
    %87 = tpu.concatenate %85, %86 in 1 : vector<2x241xf32>, vector<2x15xf32> -> vector<2x256xf32>
    %c6 = arith.constant 6 : index
    %c0_49 = arith.constant 0 : index
    %88 = vector.load %arg3[%c6, %c0_49] : memref<18x256xf32, #tpu.memory_space<vmem>>, vector<1x256xf32>
    %89 = vector.extract_strided_slice %87 {offsets = [0, 0], sizes = [1, 256], strides = [1, 1]} : vector<2x256xf32> to vector<1x256xf32>
    %90 = arith.mulf %88, %89 : vector<1x256xf32>
    %91 = arith.addf %84, %90 : vector<1x256xf32>
    %c15_50 = arith.constant 15 : index
    %c0_51 = arith.constant 0 : index
    %92 = vector.load %arg3[%c15_50, %c0_51] : memref<18x256xf32, #tpu.memory_space<vmem>>, vector<1x256xf32>
    %93 = vector.extract_strided_slice %87 {offsets = [1, 0], sizes = [1, 256], strides = [1, 1]} : vector<2x256xf32> to vector<1x256xf32>
    %94 = arith.mulf %92, %93 : vector<1x256xf32>
    %95 = arith.addf %91, %94 : vector<1x256xf32>
    %c0_52 = arith.constant 0 : index
    %c16 = arith.constant 16 : index
    %96 = vector.load %arg6[%c0_52, %c16] : memref<2x256xf32, #tpu.memory_space<vmem>>, vector<2x240xf32>
    %cst_53 = arith.constant 0.000000e+00 : f32
    %97 = vector.broadcast %cst_53 : f32 to vector<2x16xf32>
    %98 = tpu.concatenate %96, %97 in 1 : vector<2x240xf32>, vector<2x16xf32> -> vector<2x256xf32>
    %c7 = arith.constant 7 : index
    %c0_54 = arith.constant 0 : index
    %99 = vector.load %arg3[%c7, %c0_54] : memref<18x256xf32, #tpu.memory_space<vmem>>, vector<1x256xf32>
    %100 = vector.extract_strided_slice %98 {offsets = [0, 0], sizes = [1, 256], strides = [1, 1]} : vector<2x256xf32> to vector<1x256xf32>
    %101 = arith.mulf %99, %100 : vector<1x256xf32>
    %102 = arith.addf %95, %101 : vector<1x256xf32>
    %c16_55 = arith.constant 16 : index
    %c0_56 = arith.constant 0 : index
    %103 = vector.load %arg3[%c16_55, %c0_56] : memref<18x256xf32, #tpu.memory_space<vmem>>, vector<1x256xf32>
    %104 = vector.extract_strided_slice %98 {offsets = [1, 0], sizes = [1, 256], strides = [1, 1]} : vector<2x256xf32> to vector<1x256xf32>
    %105 = arith.mulf %103, %104 : vector<1x256xf32>
    %106 = arith.addf %102, %105 : vector<1x256xf32>
    %c0_57 = arith.constant 0 : index
    %c17 = arith.constant 17 : index
    %107 = vector.load %arg6[%c0_57, %c17] : memref<2x256xf32, #tpu.memory_space<vmem>>, vector<2x239xf32>
    %cst_58 = arith.constant 0.000000e+00 : f32
    %108 = vector.broadcast %cst_58 : f32 to vector<2x17xf32>
    %109 = tpu.concatenate %107, %108 in 1 : vector<2x239xf32>, vector<2x17xf32> -> vector<2x256xf32>
    %c8 = arith.constant 8 : index
    %c0_59 = arith.constant 0 : index
    %110 = vector.load %arg3[%c8, %c0_59] : memref<18x256xf32, #tpu.memory_space<vmem>>, vector<1x256xf32>
    %111 = vector.extract_strided_slice %109 {offsets = [0, 0], sizes = [1, 256], strides = [1, 1]} : vector<2x256xf32> to vector<1x256xf32>
    %112 = arith.mulf %110, %111 : vector<1x256xf32>
    %113 = arith.addf %106, %112 : vector<1x256xf32>
    %c17_60 = arith.constant 17 : index
    %c0_61 = arith.constant 0 : index
    %114 = vector.load %arg3[%c17_60, %c0_61] : memref<18x256xf32, #tpu.memory_space<vmem>>, vector<1x256xf32>
    %115 = vector.extract_strided_slice %109 {offsets = [1, 0], sizes = [1, 256], strides = [1, 1]} : vector<2x256xf32> to vector<1x256xf32>
    %116 = arith.mulf %114, %115 : vector<1x256xf32>
    %117 = arith.addf %113, %116 : vector<1x256xf32>
    %118 = arith.negf %117 : vector<1x256xf32>
    %119 = math.exp %118 : vector<1x256xf32>
    %cst_62 = arith.constant 1.000000e+00 : f32
    %120 = vector.broadcast %cst_62 : f32 to vector<1x256xf32>
    %121 = arith.addf %120, %119 : vector<1x256xf32>
    %122 = arith.divf %120, %121 : vector<1x256xf32>
    %c0_63 = arith.constant 0 : index
    %c0_64 = arith.constant 0 : index
    %123 = vector.load %arg7[%c0_63, %c0_64] : memref<1x256xf32, #tpu.memory_space<vmem>>, vector<1x256xf32>
    tpu.vector_store %arg7[%c0_63, %c0_64], %122 {strides = array<i32>} : memref<1x256xf32, #tpu.memory_space<vmem>>, vector<1x256xf32>,
    %c0_i32_65 = arith.constant 0 : i32
    %c4_i32_66 = arith.constant 4 : i32
    %124 = arith.muli %c0_i32_65, %c4_i32_66 : i32
    %125 = tpu.assume_multiple %124, 4 : i32
    %c0_67 = arith.constant 0 : index
    %126 = arith.index_cast %125 : i32 to index
    %c0_68 = arith.constant 0 : index
    %127 = vector.load %arg4[%c0_67, %126, %c0_68] : memref<1x4x256xf32, #tpu.memory_space<vmem>>, vector<1x4x256xf32>
    %128 = vector.shape_cast %127 : vector<1x4x256xf32> to vector<4x256xf32>
    %c0_69 = arith.constant 0 : index
    %c0_70 = arith.constant 0 : index
    %129 = vector.load %arg7[%c0_69, %c0_70] : memref<1x256xf32, #tpu.memory_space<vmem>>, vector<1x256xf32>
    %130 = vector.broadcast %129 : vector<1x256xf32> to vector<4x256xf32>
    %131 = arith.mulf %128, %130 : vector<4x256xf32>
    %c0_71 = arith.constant 0 : index
    %132 = arith.index_cast %125 : i32 to index
    %c0_72 = arith.constant 0 : index
    %133 = vector.load %arg5[%c0_71, %132, %c0_72] : memref<1x4x256xf32, #tpu.memory_space<vmem>>, vector<1x4x256xf32>
    %134 = vector.shape_cast %133 : vector<1x4x256xf32> to vector<4x256xf32>
    %135 = vector.shape_cast %131 : vector<4x256xf32> to vector<1x4x256xf32>
    tpu.vector_store %arg5[%c0_71, %132, %c0_72], %135 {strides = array<i32>} : memref<1x4x256xf32, #tpu.memory_space<vmem>>, vector<1x4x256xf32>,
    %c1_i32_73 = arith.constant 1 : i32
    return
  }
  func.func @transform_0(%arg0: i32, %arg1: i32) -> i32 {
    %c0_i32 = arith.constant 0 : i32
    %c0_i32_0 = arith.constant 0 : i32
    return %c0_i32 : i32
  }
  func.func @transform_1(%arg0: i32, %arg1: i32) -> (i32, i32) {
    %c0_i32 = arith.constant 0 : i32
    %c0_i32_0 = arith.constant 0 : i32
    return %c0_i32, %arg1 : i32, i32
  }
  func.func @transform_2(%arg0: i32, %arg1: i32) -> (i32, i32, i32) {
    %c0_i32 = arith.constant 0 : i32
    %c0_i32_0 = arith.constant 0 : i32
    return %arg0, %c0_i32, %arg1 : i32, i32, i32
  }
  func.func @transform_3(%arg0: i32, %arg1: i32) -> (i32, i32, i32) {
    %c0_i32 = arith.constant 0 : i32
    %c0_i32_0 = arith.constant 0 : i32
    return %arg0, %c0_i32, %arg1 : i32, i32, i32
  }
}

</mosaic_0001>

<llo_original>
// kernel: tpu_custom_call.1
$region0: #{tpu_custom_call.1}
  #allocation0 [shape = 'u32[]', space=smem, size = 0x4, offset = 0x4, fixed_abs, tag = 'smem constant byte address 0x4 - core index']
  #allocation1 [shape = 'u32[144,128]{1,0:T(1,128)}', space=vmem, size = 0x12000, scoped, tag = 'internal scratch']
  #allocation2 [shape = 'f32[2,256]{1,0:T(2,128)}', space=vmem, size = 0x800, scoped, tag = 'scratch operand']
  #allocation3 [shape = 'f32[1,256]{1,0:T(1,128)}', space=vmem, size = 0x400, scoped, tag = 'scratch operand']
  #allocation4 [shape = 'f32[1]{0:T(128)S(6)}', space=smem, size = 0x200, scoped, tag = 'scoped memory for tpu_custom_call.1']
  %s0 = inlined_call_operand.<no memory space> [shape: f32[1], index: 0, kind: input, shape index: {}]
  %s1 = inlined_call_operand.hbm [shape: f32[18,256], index: 1, kind: input, shape index: {}]
  %s2 = inlined_call_operand.hbm [shape: f32[2,4,256], index: 2, kind: input, shape index: {}]
  %s3 = inlined_call_operand.hbm [shape: f32[2,4,256], index: 3, kind: output, shape index: {}]
  %s4 = sld [smem:[#allocation0]]
  $region53: #{tpu_custom_call.1} parent=0
    _
  %s6 = ssub.s32 1, %s4
  %s7 = scalar_select 0, %s6, %s4
  %8 = sst [smem:[#allocation4]] %s0
  $region1: #{tpu_custom_call.1} parent=0
    #allocation5 [shape = 'u8[24576]{0}', space=vmem, size = 0x6000, scoped, tag = 'input window, operand 1, single buffered']
    #allocation6 [shape = 's32[2]{0}', space=sflag, size = 0x8, scoped, tag = 'scoped memory for tpu_custom_call.1']
    #allocation7 [shape = 's32[2]{0}', space=sflag, size = 0x8, scoped, tag = 'scoped memory for tpu_custom_call.1']
    #allocation8 [shape = 'u8[8192]{0}', space=vmem, size = 0x2000, scoped, tag = 'input window, operand 2']
    #allocation9 [shape = 's32[2]{0}', space=sflag, size = 0x8, scoped, tag = 'scoped memory for tpu_custom_call.1']
    #allocation10 [shape = 'u8[8192]{0}', space=vmem, size = 0x2000, scoped, tag = 'output window, operand 0']
    %9 = vsyncpa [#allocation6], 0
    %10 = vsyncpa [#allocation9], 0
    %s11 = scalar_lea.sflag [#allocation9], 1
    %12 = vsyncpa %s11, 0
    %13 = vsyncpa [#allocation7], 0
    %s14 = scalar_lea.sflag [#allocation7], 1
    %15 = vsyncpa %s14, 0
    loop: start=0, step=1, limit=4
    $region2: #{tpu_custom_call.1} parent=1 // loop_pre_header
      _
    $region3: #{tpu_custom_call.1} parent=1 // loop_header
      %s17 = sphi 0, %s21
      %p18 = scmp.ge.s32.totalorder %s17, 4
      %s24 = sphi 0, %s36
      %s25 = sphi 0, %s32
      %s26 = sphi 0, %s24
      %s27 = sphi 0, %s25
      %s28 = sphi 0, %s26
      %s29 = sphi 0, %s27
      %s37 = sphi 0, %s37
      %s39 = sphi 0, %s37
      %s40 = sphi 0, %s39
      %s54 = sphi 0, %s40
      %s60 = sphi 0, %s62
      %s63 = sphi 0, %s60
      %s64 = sphi 0, %s63
      %s80 = sphi 0, %s64
      %s88 = sphi 0, %s90
      %s91 = sphi 0, %s88
      %s92 = sphi 0, %s91
      %s108 = sphi 0, %s92
      %s116 = sphi 0, %s118
      %s119 = sphi 0, %s116
      %s120 = sphi 0, %s119
      %s136 = sphi 0, %s120
    $region4: #{tpu_custom_call.1} parent=1 // loop_header_branch
      %20 = sbr.rel (%p18) target = $region8
    $region5: #{tpu_custom_call.1} parent=1 // loop_body
      %s22 = ssub.s32 %s17, 1
      %s23 = ssub.s32 %s17, 2
      %s30 = sadd.s32 1, %s25
      %p31 = scmp.ge.s32.totalorder %s30, 1
      %s32 = scalar_select %p31, 0, %s30
      %s33 = sadd.s32 1, %s24
      %s34 = scalar_select %p31, %s33, %s24
      %p35 = scmp.ge.s32.totalorder %s34, 2
      %s36 = scalar_select %p35, 0, %s34
      %s38 = sadd.s32 %s37, 1
      %p41 = scmp.eq.s32.totalorder %s17, 1
      %p42 = scmp.ne.s32.totalorder %s37, %s39
      %p43 = scmp.eq.s32.totalorder %s17, 0
      %p44 = por %p42, %p43
      %p45 = scmp.ne.s32.totalorder %s37, %s39
      %p46 = scmp.eq.s32.totalorder %s22, 1
      %p47 = por %p45, %p46
      %p48 = scmp.ne.s32.totalorder %s39, %s40
      %p49 = scmp.eq.s32.totalorder %s22, 0
      %p50 = por %p48, %p49
      %p51 = scmp.ne.s32.totalorder %s39, %s40
      %p52 = scmp.eq.s32.totalorder %s23, 1
      %p53 = por %p51, %p52
      %p55 = scmp.ne.s32.totalorder %s40, %s54
      %p56 = scmp.eq.s32.totalorder %s23, 0
      %p57 = por %p55, %p56
      %s58 = ssub.s32 %s25, %s32
      %p59 = scmp.eq.s32.totalorder %s58, 0
      %s61 = sadd.s32 %s60, 1
      %s62 = scalar_select %p59, %s60, %s61
      %p65 = pneg %p59
      %p66 = scmp.eq.s32.totalorder %s17, 1
      %p67 = por %p65, %p66
      %p68 = scmp.ne.s32.totalorder %s60, %s63
      %p69 = scmp.eq.s32.totalorder %s17, 0
      %p70 = por %p68, %p69
      %p71 = scmp.ne.s32.totalorder %s60, %s63
      %p72 = scmp.eq.s32.totalorder %s22, 1
      %p73 = por %p71, %p72
      %p74 = scmp.ne.s32.totalorder %s63, %s64
      %p75 = scmp.eq.s32.totalorder %s22, 0
      %p76 = por %p74, %p75
      %p77 = scmp.ne.s32.totalorder %s63, %s64
      %p78 = scmp.eq.s32.totalorder %s23, 1
      %p79 = por %p77, %p78
      %p81 = scmp.ne.s32.totalorder %s64, %s80
      %p82 = scmp.eq.s32.totalorder %s23, 0
      %p83 = por %p81, %p82
      %s84 = ssub.s32 %s24, %s36
      %s85 = ssub.s32 %s25, %s32
      %s86 = sor.u32 %s84, %s85
      %p87 = scmp.eq.s32.totalorder %s86, 0
      %s89 = sadd.s32 %s88, 1
      %s90 = scalar_select %p87, %s88, %s89
      %p93 = pneg %p87
      %p94 = scmp.eq.s32.totalorder %s17, 1
      %p95 = por %p93, %p94
      %p96 = scmp.ne.s32.totalorder %s88, %s91
      %p97 = scmp.eq.s32.totalorder %s17, 0
      %p98 = por %p96, %p97
      %p99 = scmp.ne.s32.totalorder %s88, %s91
      %p100 = scmp.eq.s32.totalorder %s22, 1
      %p101 = por %p99, %p100
      %p102 = scmp.ne.s32.totalorder %s91, %s92
      %p103 = scmp.eq.s32.totalorder %s22, 0
      %p104 = por %p102, %p103
      %p105 = scmp.ne.s32.totalorder %s91, %s92
      %p106 = scmp.eq.s32.totalorder %s23, 1
      %p107 = por %p105, %p106
      %p109 = scmp.ne.s32.totalorder %s92, %s108
      %p110 = scmp.eq.s32.totalorder %s23, 0
      %p111 = por %p109, %p110
      %s112 = ssub.s32 %s24, %s36
      %s113 = ssub.s32 %s25, %s32
      %s114 = sor.u32 %s112, %s113
      %p115 = scmp.eq.s32.totalorder %s114, 0
      %s117 = sadd.s32 %s116, 1
      %s118 = scalar_select %p115, %s116, %s117
      %p121 = pneg %p115
      %p122 = scmp.eq.s32.totalorder %s17, 1
      %p123 = por %p121, %p122
      %p124 = scmp.ne.s32.totalorder %s116, %s119
      %p125 = scmp.eq.s32.totalorder %s17, 0
      %p126 = por %p124, %p125
      %p127 = scmp.ne.s32.totalorder %s116, %s119
      %p128 = scmp.eq.s32.totalorder %s22, 1
      %p129 = por %p127, %p128
      %p130 = scmp.ne.s32.totalorder %s119, %s120
      %p131 = scmp.eq.s32.totalorder %s22, 0
      %p132 = por %p130, %p131
      %p133 = scmp.ne.s32.totalorder %s119, %s120
      %p134 = scmp.eq.s32.totalorder %s23, 1
      %p135 = por %p133, %p134
      %p137 = scmp.ne.s32.totalorder %s120, %s136
      %p138 = scmp.eq.s32.totalorder %s23, 0
      %p139 = por %p137, %p138
      %p140 = scmp.le.s32.totalorder 1, %s17
      %p141 = scmp.lt.s32.totalorder %s17, 3
      %p142 = pnand %p140, %p141
      %p143 = pneg %p142
      // Predicated region
      $region9: #{tpu_custom_call.1} parent=5 // pred_check
        _
      $region10: #{tpu_custom_call.1} parent=5 // pred_check_branch
        %145 = sbr.rel (%p142) target = $region12
      $region11: #{tpu_custom_call.1} parent=5 // pred_region
        %s146 = ssub.s32 %s17, 1
        // Predicated region
        $region13: #{tpu_custom_call.1} parent=11 // pred_check
          %p147 = pneg %p50
        $region14: #{tpu_custom_call.1} parent=11 // pred_check_branch
          %149 = sbr.rel (%p147) target = $region16
        $region15: #{tpu_custom_call.1} parent=11 // pred_region
          _
        $region16: #{tpu_custom_call.1} parent=11 // pred_fallthru
          _
        // Predicated region
        $region17: #{tpu_custom_call.1} parent=11 // pred_check
          %p150 = pneg %p76
        $region18: #{tpu_custom_call.1} parent=11 // pred_check_branch
          %152 = sbr.rel (%p150) target = $region20
        $region19: #{tpu_custom_call.1} parent=11 // pred_region
          %s153 = smul.u32 2, %s27
          %s155 = ssub.s32 768, 768
          %156 = vsyncadd [#allocation6], %s155
          %s157 = smul.addr %s153, 128
          %s158 = scalar_lea.hbm %s1, %s157
          %s159 = sshll.u32 [#allocation5], 4
          %s160 = int_to_ptr.vmem [resolvable:$true] %s159
          %165 = dma.hbm_to_vmem [thread:$0]  %s158, 768, %s160, [#allocation6], 256, 256, 16
        $region20: #{tpu_custom_call.1} parent=11 // pred_fallthru
          _
      $region12: #{tpu_custom_call.1} parent=5 // pred_fallthru
        _
      %p166 = scmp.lt.s32.totalorder %s17, 2
      // Predicated region
      $region21: #{tpu_custom_call.1} parent=5 // pred_check
        %p167 = pneg %p166
      $region22: #{tpu_custom_call.1} parent=5 // pred_check_branch
        %169 = sbr.rel (%p167) target = $region24
      $region23: #{tpu_custom_call.1} parent=5 // pred_region
        // Predicated region
        $region25: #{tpu_custom_call.1} parent=23 // pred_check
          %p170 = pneg %p98
        $region26: #{tpu_custom_call.1} parent=23 // pred_check_branch
          %172 = sbr.rel (%p170) target = $region28
        $region27: #{tpu_custom_call.1} parent=23 // pred_region
          %s173 = sand.u32 %s88, 1
          %s174 = scalar_lea.sflag [#allocation9], %s173
          %s175 = sand.u32 %s88, 1
          %s176 = smul.addr %s175, 8
          %s177 = scalar_lea.vmem [#allocation8], %s176
          %s178 = smul.u32 2, %s25
          %s180 = ssub.s32 128, 128
          %181 = vsyncadd %s174, %s180
          %s182 = smul.addr %s24, 2
          %s183 = sadd.s32 %s178, %s182
          %s184 = smul.addr %s183, 64
          %s185 = scalar_lea.hbm %s2, %s184
          %s187 = sshll.u32 %s177, 4
          %s188 = int_to_ptr.vmem [resolvable:$true] %s187
          %190 = dma.hbm_to_vmem [thread:$0]  %s185, 128, %s188, %s174
        $region28: #{tpu_custom_call.1} parent=23 // pred_fallthru
          _
      $region24: #{tpu_custom_call.1} parent=5 // pred_fallthru
        _
      %p191 = scmp.le.s32.totalorder 1, %s17
      %p192 = scmp.lt.s32.totalorder %s17, 3
      %p193 = pnand %p191, %p192
      %p194 = pneg %p193
      // Predicated region
      $region29: #{tpu_custom_call.1} parent=5 // pred_check
        _
      $region30: #{tpu_custom_call.1} parent=5 // pred_check_branch
        %196 = sbr.rel (%p193) target = $region32
      $region31: #{tpu_custom_call.1} parent=5 // pred_region
        %s197 = ssub.s32 %s17, 1
        // Predicated region
        $region33: #{tpu_custom_call.1} parent=31 // pred_check
          %p198 = pneg %p76
        $region34: #{tpu_custom_call.1} parent=31 // pred_check_branch
          %200 = sbr.rel (%p198) target = $region36
        $region35: #{tpu_custom_call.1} parent=31 // pred_region
          %201 = dma.done [#allocation6], 768
        $region36: #{tpu_custom_call.1} parent=31 // pred_fallthru
          _
        %s202 = sand.u32 %s91, 1
        %s203 = scalar_lea.sflag [#allocation9], %s202
        %s204 = sand.u32 %s91, 1
        %s205 = smul.addr %s204, 8
        %s206 = scalar_lea.vmem [#allocation8], %s205
        // Predicated region
        $region37: #{tpu_custom_call.1} parent=31 // pred_check
          %p207 = pneg %p104
        $region38: #{tpu_custom_call.1} parent=31 // pred_check_branch
          %209 = sbr.rel (%p207) target = $region40
        $region39: #{tpu_custom_call.1} parent=31 // pred_region
          %210 = dma.done %s203, 128
        $region40: #{tpu_custom_call.1} parent=31 // pred_fallthru
          _
        %p211 = pneg %p50
        %p212 = pneg %p47
        %p213 = pneg %p76
        %p214 = pneg %p73
        %s215 = sand.u32 %s91, 1
        %s216 = scalar_lea.sflag [#allocation9], %s215
        %s217 = sand.u32 %s91, 1
        %s218 = smul.addr %s217, 8
        %s219 = scalar_lea.vmem [#allocation8], %s218
        %p220 = pneg %p104
        %p221 = pneg %p101
        %p222 = pneg %p132
        %p223 = pneg %p129
        %s224 = sand.u32 %s119, 1
        %s225 = scalar_lea.sflag [#allocation7], %s224
        %s226 = sand.u32 %s119, 1
        %s227 = smul.addr %s226, 8
        %s228 = scalar_lea.vmem [#allocation10], %s227
        %s229 = smul.u32 2, %s27
        %s230 = smul.u32 2, %s27
        %s231 = smul.u32 2, %s27
        %v232 = vlaneseq
        %vm233 = vcmp.ge.s32.totalorder %v232, 0
        %vm234 = vcmp.lt.s32.totalorder %v232, 256
        %vm235 = vmand %vm233, %vm234
        %236 = vst.msk [vmem:[#allocation2] ss:$2 sm:$0x3] %vm235, 0.0
        %s237 = scalar_lea.vmem [#allocation2], 1
        %238 = vst.msk [vmem:[%s237] ss:$2 sm:$0x3] %vm235, -inf
        %s239 = smul.u32 0, 2
        %s240 = smul.addr %s239, 4
        %s241 = scalar_lea.vmem %s206, %s240 [#allocation8]
        %v242 = vld [vmem:[%s241] sm:$0xff]
        %v243 = vld [vmem:[#allocation2] ss:$2 sm:$0x3]
        %v245 = vcombine.high %v242, %v242
        %vm247 = vcmask 1043456
        %v248 = vsel %vm247, %v242, 0.0
        %v249 = vrot.slane %v248, 4
        %v250 = vadd.f32 %v248, %v249
        %v251 = vrot.slane %v250, 2
        %v252 = vadd.f32 %v250, %v251
        %v253 = vrot.slane %v252, 1
        %v254 = vadd.f32 %v252, %v253
        %v255 = vsel %vm247, %v245, 0.0
        %v256 = vrot.slane %v255, 4
        %v257 = vadd.f32 %v255, %v256
        %v258 = vrot.slane %v257, 2
        %v259 = vadd.f32 %v257, %v258
        %v260 = vrot.slane %v259, 1
        %v261 = vadd.f32 %v259, %v260
        %v264 = vcombine.low %v254, %v261
        %v266 = vunpack.c.l.s4 1966171168
        %v267 = vunpack.c.0.s8 %v266
        %v268 = vlaneseq
        %v269 = vshrl.u32 %v268, 7
        %v270 = vsub.s32 %v267, %v269
        %v271 = vrot.slane %v264, %v270
        %v273 = vunpack.c.l.s4 1966171168
        %v274 = vunpack.c.0.s8 %v273
        %v275 = vlaneseq
        %v276 = vshrl.u32 %v275, 7
        %v277 = vsub.s32 %v274, %v276
        %v278 = vrot.slane %v271, %v277
        %v280 = vadd.f32 %v243, %v278
        %281 = vst.msk [vmem:[#allocation2] ss:$2 sm:$0x3] %vm235, %v280
        %v282 = vld [vmem:[%s237] ss:$2 sm:$0x3]
        %v283 = vsel %vm247, %v242, -inf
        %v284 = vrot.slane %v283, 4
        %v285 = vmax.f32 %v283, %v284
        %v286 = vrot.slane %v285, 2
        %v287 = vmax.f32 %v285, %v286
        %v288 = vrot.slane %v287, 1
        %v289 = vmax.f32 %v287, %v288
        %v290 = vsel %vm247, %v245, -inf
        %v291 = vrot.slane %v290, 4
        %v292 = vmax.f32 %v290, %v291
        %v293 = vrot.slane %v292, 2
        %v294 = vmax.f32 %v292, %v293
        %v295 = vrot.slane %v294, 1
        %v296 = vmax.f32 %v294, %v295
        %v299 = vcombine.low %v289, %v296
        %v301 = vunpack.c.l.s4 1966171168
        %v302 = vunpack.c.0.s8 %v301
        %v303 = vlaneseq
        %v304 = vshrl.u32 %v303, 7
        %v305 = vsub.s32 %v302, %v304
        %v306 = vrot.slane %v299, %v305
        %v308 = vunpack.c.l.s4 1966171168
        %v309 = vunpack.c.0.s8 %v308
        %v310 = vlaneseq
        %v311 = vshrl.u32 %v310, 7
        %v312 = vsub.s32 %v309, %v311
        %v313 = vrot.slane %v306, %v312
        %v315 = vmax.f32 %v282, %v313
        %316 = vst.msk [vmem:[%s237] ss:$2 sm:$0x3] %vm235, %v315
        %s317 = sld [smem:[#allocation4]]
        %v318 = vstv %s317
        %v319 = vld [vmem:[#allocation2] sm:$0xf]
        %v322 = vunpack.c.l.s4 1983009808
        %v323 = vunpack.c.0.s8 %v322
        %v324 = vlaneseq
        %v325 = vshrl.u32 %v324, 7
        %v326 = vsub.s32 %v323, %v325
        %v327 = vrot.slane %v319, %v326
        %v328 = vcombine.high %v327, %v327
        %329 = vrot.lane.b32.xlu0 %v327, 17
        %v330 = vpop.permute.xlu0 %329
        %331 = vrot.lane.b32.xlu0 %v328, 17
        %v332 = vpop.permute.xlu0 %331
        %vm333 = vcmask 138240
        %v334 = vsel %vm333, %v330, %v332
        %v336 = vsel %vm333, 0.0, %v330
        %v337 = vld [vmem:[#allocation5] ss:$8 sm:$0x3]
        %v339 = vcombine.low %v336, %v334
        %v341 = vunpack.c.l.s4 1966171168
        %v342 = vunpack.c.0.s8 %v341
        %v343 = vlaneseq
        %v344 = vshrl.u32 %v343, 7
        %v345 = vsub.s32 %v342, %v344
        %v346 = vrot.slane %v339, %v345
        %v348 = vunpack.c.l.s4 1966171168
        %v349 = vunpack.c.0.s8 %v348
        %v350 = vlaneseq
        %v351 = vshrl.u32 %v350, 7
        %v352 = vsub.s32 %v349, %v351
        %v353 = vrot.slane %v346, %v352
        %v355 = vmul.f32 %v337, %v353
        %v356 = vadd.f32 %v318, %v355
        %s357 = scalar_lea.vmem [#allocation5], 17
        %v358 = vld [vmem:[%s357] ss:$8 sm:$0x3]
        %v359 = vcombine.high %v346, %v346
        %v361 = vunpack.c.l.s4 1966171168
        %v362 = vunpack.c.0.s8 %v361
        %v363 = vlaneseq
        %v364 = vshrl.u32 %v363, 7
        %v365 = vsub.s32 %v362, %v364
        %v366 = vrot.slane %v359, %v365
        %v368 = vmul.f32 %v358, %v366
        %v369 = vadd.f32 %v356, %v368
        %370 = vrot.lane.b32.xlu0 %v327, 16
        %v371 = vpop.permute.xlu0 %370
        %372 = vrot.lane.b32.xlu0 %v328, 16
        %v373 = vpop.permute.xlu0 %372
        %vm374 = vcmask 130048
        %v375 = vsel %vm374, %v371, %v373
        %v377 = vsel %vm374, 0.0, %v371
        %s378 = scalar_lea.vmem [#allocation5], 1
        %v379 = vld [vmem:[%s378] ss:$8 sm:$0x3]
        %v381 = vcombine.low %v377, %v375
        %v383 = vunpack.c.l.s4 1966171168
        %v384 = vunpack.c.0.s8 %v383
        %v385 = vlaneseq
        %v386 = vshrl.u32 %v385, 7
        %v387 = vsub.s32 %v384, %v386
        %v388 = vrot.slane %v381, %v387
        %v390 = vunpack.c.l.s4 1966171168
        %v391 = vunpack.c.0.s8 %v390
        %v392 = vlaneseq
        %v393 = vshrl.u32 %v392, 7
        %v394 = vsub.s32 %v391, %v393
        %v395 = vrot.slane %v388, %v394
        %v397 = vmul.f32 %v379, %v395
        %v398 = vadd.f32 %v369, %v397
        %s399 = scalar_lea.vmem [#allocation5], 18
        %v400 = vld [vmem:[%s399] ss:$8 sm:$0x3]
        %v401 = vcombine.high %v388, %v388
        %v403 = vunpack.c.l.s4 1966171168
        %v404 = vunpack.c.0.s8 %v403
        %v405 = vlaneseq
        %v406 = vshrl.u32 %v405, 7
        %v407 = vsub.s32 %v404, %v406
        %v408 = vrot.slane %v401, %v407
        %v410 = vmul.f32 %v400, %v408
        %v411 = vadd.f32 %v398, %v410
        %412 = vrot.lane.b32.xlu0 %v327, 15
        %v413 = vpop.permute.xlu0 %412
        %414 = vrot.lane.b32.xlu0 %v328, 15
        %v415 = vpop.permute.xlu0 %414
        %vm416 = vcmask 121856
        %v417 = vsel %vm416, %v413, %v415
        %v419 = vsel %vm416, 0.0, %v413
        %s420 = scalar_lea.vmem [#allocation5], 2
        %v421 = vld [vmem:[%s420] ss:$8 sm:$0x3]
        %v423 = vcombine.low %v419, %v417
        %v425 = vunpack.c.l.s4 1966171168
        %v426 = vunpack.c.0.s8 %v425
        %v427 = vlaneseq
        %v428 = vshrl.u32 %v427, 7
        %v429 = vsub.s32 %v426, %v428
        %v430 = vrot.slane %v423, %v429
        %v432 = vunpack.c.l.s4 1966171168
        %v433 = vunpack.c.0.s8 %v432
        %v434 = vlaneseq
        %v435 = vshrl.u32 %v434, 7
        %v436 = vsub.s32 %v433, %v435
        %v437 = vrot.slane %v430, %v436
        %v439 = vmul.f32 %v421, %v437
        %v440 = vadd.f32 %v411, %v439
        %s441 = scalar_lea.vmem [#allocation5], 19
        %v442 = vld [vmem:[%s441] ss:$8 sm:$0x3]
        %v443 = vcombine.high %v430, %v430
        %v445 = vunpack.c.l.s4 1966171168
        %v446 = vunpack.c.0.s8 %v445
        %v447 = vlaneseq
        %v448 = vshrl.u32 %v447, 7
        %v449 = vsub.s32 %v446, %v448
        %v450 = vrot.slane %v443, %v449
        %v452 = vmul.f32 %v442, %v450
        %v453 = vadd.f32 %v440, %v452
        %454 = vrot.lane.b32.xlu0 %v327, 1
        %v455 = vpop.permute.xlu0 %454
        %456 = vrot.lane.b32.xlu0 %v328, 1
        %v457 = vpop.permute.xlu0 %456
        %vm458 = vcmask 7168
        %v459 = vsel %vm458, %v455, %v457
        %v461 = vsel %vm458, 0.0, %v455
        %s462 = scalar_lea.vmem [#allocation5], 3
        %v463 = vld [vmem:[%s462] ss:$8 sm:$0x3]
        %v465 = vcombine.low %v461, %v459
        %v467 = vunpack.c.l.s4 1966171168
        %v468 = vunpack.c.0.s8 %v467
        %v469 = vlaneseq
        %v470 = vshrl.u32 %v469, 7
        %v471 = vsub.s32 %v468, %v470
        %v472 = vrot.slane %v465, %v471
        %v474 = vunpack.c.l.s4 1966171168
        %v475 = vunpack.c.0.s8 %v474
        %v476 = vlaneseq
        %v477 = vshrl.u32 %v476, 7
        %v478 = vsub.s32 %v475, %v477
        %v479 = vrot.slane %v472, %v478
        %v481 = vmul.f32 %v463, %v479
        %v482 = vadd.f32 %v453, %v481
        %s483 = scalar_lea.vmem [#allocation5], 20
        %v484 = vld [vmem:[%s483] ss:$8 sm:$0x3]
        %v485 = vcombine.high %v472, %v472
        %v487 = vunpack.c.l.s4 1966171168
        %v488 = vunpack.c.0.s8 %v487
        %v489 = vlaneseq
        %v490 = vshrl.u32 %v489, 7
        %v491 = vsub.s32 %v488, %v490
        %v492 = vrot.slane %v485, %v491
        %v494 = vmul.f32 %v484, %v492
        %v495 = vadd.f32 %v482, %v494
        %s496 = scalar_lea.vmem [#allocation5], 4
        %v497 = vld [vmem:[%s496] ss:$8 sm:$0x3]
        %v499 = vunpack.c.l.s4 1966171168
        %v500 = vunpack.c.0.s8 %v499
        %v501 = vlaneseq
        %v502 = vshrl.u32 %v501, 7
        %v503 = vsub.s32 %v500, %v502
        %v504 = vrot.slane %v319, %v503
        %v506 = vmul.f32 %v497, %v504
        %v507 = vadd.f32 %v495, %v506
        %s508 = scalar_lea.vmem [#allocation5], 21
        %v509 = vld [vmem:[%s508] ss:$8 sm:$0x3]
        %v510 = vcombine.high %v504, %v504
        %v512 = vmul.f32 %v509, %v510
        %v513 = vadd.f32 %v507, %v512
        %514 = vrot.lane.b32.xlu0 %v327, 127
        %v515 = vpop.permute.xlu0 %514
        %516 = vrot.lane.b32.xlu0 %v328, 127
        %v517 = vpop.permute.xlu0 %516
        %vm518 = vcmask 1039360
        %v519 = vsel %vm518, %v515, %v517
        %v521 = vsel %vm518, %v517, 0.0
        %s522 = scalar_lea.vmem [#allocation5], 5
        %v523 = vld [vmem:[%s522] ss:$8 sm:$0x3]
        %v525 = vcombine.low %v519, %v521
        %v527 = vunpack.c.l.s4 1966171168
        %v528 = vunpack.c.0.s8 %v527
        %v529 = vlaneseq
        %v530 = vshrl.u32 %v529, 7
        %v531 = vsub.s32 %v528, %v530
        %v532 = vrot.slane %v525, %v531
        %v534 = vunpack.c.l.s4 1966171168
        %v535 = vunpack.c.0.s8 %v534
        %v536 = vlaneseq
        %v537 = vshrl.u32 %v536, 7
        %v538 = vsub.s32 %v535, %v537
        %v539 = vrot.slane %v532, %v538
        %v541 = vmul.f32 %v523, %v539
        %v542 = vadd.f32 %v513, %v541
        %s543 = scalar_lea.vmem [#allocation5], 22
        %v544 = vld [vmem:[%s543] ss:$8 sm:$0x3]
        %v545 = vcombine.high %v532, %v532
        %v547 = vunpack.c.l.s4 1966171168
        %v548 = vunpack.c.0.s8 %v547
        %v549 = vlaneseq
        %v550 = vshrl.u32 %v549, 7
        %v551 = vsub.s32 %v548, %v550
        %v552 = vrot.slane %v545, %v551
        %v554 = vmul.f32 %v544, %v552
        %v555 = vadd.f32 %v542, %v554
        %556 = vrot.lane.b32.xlu0 %v327, 113
        %v557 = vpop.permute.xlu0 %556
        %558 = vrot.lane.b32.xlu0 %v328, 113
        %v559 = vpop.permute.xlu0 %558
        %vm560 = vcmask 924672
        %v561 = vsel %vm560, %v557, %v559
        %v563 = vsel %vm560, %v559, 0.0
        %s564 = scalar_lea.vmem [#allocation5], 6
        %v565 = vld [vmem:[%s564] ss:$8 sm:$0x3]
        %v567 = vcombine.low %v561, %v563
        %v569 = vunpack.c.l.s4 1966171168
        %v570 = vunpack.c.0.s8 %v569
        %v571 = vlaneseq
        %v572 = vshrl.u32 %v571, 7
        %v573 = vsub.s32 %v570, %v572
        %v574 = vrot.slane %v567, %v573
        %v576 = vunpack.c.l.s4 1966171168
        %v577 = vunpack.c.0.s8 %v576
        %v578 = vlaneseq
        %v579 = vshrl.u32 %v578, 7
        %v580 = vsub.s32 %v577, %v579
        %v581 = vrot.slane %v574, %v580
        %v583 = vmul.f32 %v565, %v581
        %v584 = vadd.f32 %v555, %v583
        %s585 = scalar_lea.vmem [#allocation5], 23
        %v586 = vld [vmem:[%s585] ss:$8 sm:$0x3]
        %v587 = vcombine.high %v574, %v574
        %v589 = vunpack.c.l.s4 1966171168
        %v590 = vunpack.c.0.s8 %v589
        %v591 = vlaneseq
        %v592 = vshrl.u32 %v591, 7
        %v593 = vsub.s32 %v590, %v592
        %v594 = vrot.slane %v587, %v593
        %v596 = vmul.f32 %v586, %v594
        %v597 = vadd.f32 %v584, %v596
        %598 = vrot.lane.b32.xlu0 %v327, 112
        %v599 = vpop.permute.xlu0 %598
        %600 = vrot.lane.b32.xlu0 %v328, 112
        %v601 = vpop.permute.xlu0 %600
        %vm602 = vcmask 916480
        %v603 = vsel %vm602, %v599, %v601
        %v605 = vsel %vm602, %v601, 0.0
        %s606 = scalar_lea.vmem [#allocation5], 7
        %v607 = vld [vmem:[%s606] ss:$8 sm:$0x3]
        %v609 = vcombine.low %v603, %v605
        %v611 = vunpack.c.l.s4 1966171168
        %v612 = vunpack.c.0.s8 %v611
        %v613 = vlaneseq
        %v614 = vshrl.u32 %v613, 7
        %v615 = vsub.s32 %v612, %v614
        %v616 = vrot.slane %v609, %v615
        %v618 = vunpack.c.l.s4 1966171168
        %v619 = vunpack.c.0.s8 %v618
        %v620 = vlaneseq
        %v621 = vshrl.u32 %v620, 7
        %v622 = vsub.s32 %v619, %v621
        %v623 = vrot.slane %v616, %v622
        %v625 = vmul.f32 %v607, %v623
        %v626 = vadd.f32 %v597, %v625
        %s627 = scalar_lea.vmem [#allocation5], 32
        %v628 = vld [vmem:[%s627] ss:$8 sm:$0x3]
        %v629 = vcombine.high %v616, %v616
        %v631 = vunpack.c.l.s4 1966171168
        %v632 = vunpack.c.0.s8 %v631
        %v633 = vlaneseq
        %v634 = vshrl.u32 %v633, 7
        %v635 = vsub.s32 %v632, %v634
        %v636 = vrot.slane %v629, %v635
        %v638 = vmul.f32 %v628, %v636
        %v639 = vadd.f32 %v626, %v638
        %640 = vrot.lane.b32.xlu0 %v327, 111
        %v641 = vpop.permute.xlu0 %640
        %642 = vrot.lane.b32.xlu0 %v328, 111
        %v643 = vpop.permute.xlu0 %642
        %vm644 = vcmask 908288
        %v645 = vsel %vm644, %v641, %v643
        %v647 = vsel %vm644, %v643, 0.0
        %s648 = scalar_lea.vmem [#allocation5], 16
        %v649 = vld [vmem:[%s648] ss:$8 sm:$0x3]
        %v651 = vcombine.low %v645, %v647
        %v653 = vunpack.c.l.s4 1966171168
        %v654 = vunpack.c.0.s8 %v653
        %v655 = vlaneseq
        %v656 = vshrl.u32 %v655, 7
        %v657 = vsub.s32 %v654, %v656
        %v658 = vrot.slane %v651, %v657
        %v660 = vunpack.c.l.s4 1966171168
        %v661 = vunpack.c.0.s8 %v660
        %v662 = vlaneseq
        %v663 = vshrl.u32 %v662, 7
        %v664 = vsub.s32 %v661, %v663
        %v665 = vrot.slane %v658, %v664
        %v667 = vmul.f32 %v649, %v665
        %v668 = vadd.f32 %v639, %v667
        %s669 = scalar_lea.vmem [#allocation5], 33
        %v670 = vld [vmem:[%s669] ss:$8 sm:$0x3]
        %v671 = vcombine.high %v658, %v658
        %v673 = vunpack.c.l.s4 1966171168
        %v674 = vunpack.c.0.s8 %v673
        %v675 = vlaneseq
        %v676 = vshrl.u32 %v675, 7
        %v677 = vsub.s32 %v674, %v676
        %v678 = vrot.slane %v671, %v677
        %v680 = vmul.f32 %v670, %v678
        %v681 = vadd.f32 %v668, %v680
        %v682 = vxor.u32 %v681, 2147483648
        %v683 = vmul.f32 %v682, 1.442695
        %v684 = vpow.pop %v683
        %v685 = vadd.f32 %v684, 1.0
        %v686 = vrcp.pop %v685
        %v687 = vmul.f32 1.0, %v686
        %688 = vst.msk [vmem:[#allocation3] sm:$0x3] %vm235, %v687
        %v689 = vld [vmem:[%s241] sm:$0xff]
        %v690 = vld [vmem:[#allocation3] sm:$0x3]
        %v692 = vlaneseq
        %v693 = vshrl.u32 %v692, 7
        %v694 = vsub.s32 0, %v693
        %v695 = vrot.slane %v690, %v694
        %v696 = vlaneseq
        %v697 = vshrl.u32 %v696, 7
        %v698 = vsub.s32 1, %v697
        %v699 = vrot.slane %v690, %v698
        %v700 = vcombine.low %v695, %v699
        %v702 = vmul.f32 %v689, %v700
        %s703 = smul.addr %s239, 4
        %s704 = scalar_lea.vmem %s228, %s703 [#allocation10]
        %705 = vst [vmem:[%s704] sm:$0xff] %v702
        %s706 = sand.u32 %s119, 1
        %s707 = scalar_lea.sflag [#allocation7], %s706
        %s708 = sand.u32 %s119, 1
        %s709 = smul.addr %s708, 8
        %s710 = scalar_lea.vmem [#allocation10], %s709
        // Predicated region
        $region41: #{tpu_custom_call.1} parent=31 // pred_check
          %p711 = pneg %p129
        $region42: #{tpu_custom_call.1} parent=31 // pred_check_branch
          %713 = sbr.rel (%p711) target = $region44
        $region43: #{tpu_custom_call.1} parent=31 // pred_region
          %s714 = smul.u32 2, %s27
          %s716 = ssub.s32 128, 128
          %717 = vsyncadd %s707, %s716
          %s718 = smul.addr %s26, 2
          %s719 = sadd.s32 %s714, %s718
          %s720 = smul.addr %s719, 64
          %s721 = scalar_lea.hbm %s3, %s720
          %s723 = sshll.u32 %s710, 4
          %s724 = int_to_ptr.vmem [resolvable:$true] %s723
          %726 = dma.vmem_to_hbm [thread:$0]  %s724, 128, %s721, %s707
        $region44: #{tpu_custom_call.1} parent=31 // pred_fallthru
          _
      $region32: #{tpu_custom_call.1} parent=5 // pred_fallthru
        _
      %p727 = scmp.le.s32.totalorder 2, %s17
      // Predicated region
      $region45: #{tpu_custom_call.1} parent=5 // pred_check
        %p728 = pneg %p727
      $region46: #{tpu_custom_call.1} parent=5 // pred_check_branch
        %730 = sbr.rel (%p728) target = $region48
      $region47: #{tpu_custom_call.1} parent=5 // pred_region
        %s731 = ssub.s32 %s17, 2
        // Predicated region
        $region49: #{tpu_custom_call.1} parent=47 // pred_check
          %p732 = pneg %p135
        $region50: #{tpu_custom_call.1} parent=47 // pred_check_branch
          %734 = sbr.rel (%p732) target = $region52
        $region51: #{tpu_custom_call.1} parent=47 // pred_region
          %s735 = sand.u32 %s120, 1
          %s736 = scalar_lea.sflag [#allocation7], %s735
          %s737 = sand.u32 %s120, 1
          %s738 = smul.addr %s737, 8
          %s739 = scalar_lea.vmem [#allocation10], %s738
          %740 = dma.done %s736, 128
        $region52: #{tpu_custom_call.1} parent=47 // pred_fallthru
          _
      $region48: #{tpu_custom_call.1} parent=5 // pred_fallthru
        _
    $region6: #{tpu_custom_call.1} parent=1 // loop_footer
      %s21 = sadd.s32 1, %s17
    $region7: #{tpu_custom_call.1} parent=1 // loop_footer_branch
      %16 = sbr.rel target = $region3
    $region8: #{tpu_custom_call.1} parent=1 // loop_exit
      _
    %741 = vsyncpa [#allocation6], 1
    %s742 = scalar_lea.sflag [#allocation6], 1
    %743 = vsyncpa %s742, 1
    %744 = vsyncpa [#allocation9], 1
    %s745 = scalar_lea.sflag [#allocation9], 1
    %746 = vsyncpa %s745, 1
    %747 = vsyncpa [#allocation7], 1
    %s748 = scalar_lea.sflag [#allocation7], 1
    %749 = vsyncpa %s748, 1

</llo_original>
